<compile_context>
chip_gen: v6e
topology: v6e:2x2x1
jax: 0.10.0
libtpu: 0.0.40
codegen_flags: <defaults>
</compile_context>

<pallas_src>
import jax
import jax.numpy as jnp
from jax.experimental import pallas as pl
from jax.experimental.pallas import tpu as pltpu

DT = 0.1  # integrator step size (matches `self.dt` in the PyTorch module)

# Budget for the double-buffered (state, value, out) windows; at H=128 this
# yields a ~2048-row batch tile (measured Pallas data: 512+ row tiles reach
# ~85% of HBM roofline vs ~29% at 128).
_WIN_BUDGET_BYTES = 8 << 20


def _round_up(x, m):
    return ((x + m - 1) // m) * m


def _vjrk4_kernel(state_ref, value_ref, w_ref, wt_ref, bias_ref, out_ref):
    """One batch tile: RK4 forward stages + fused state-VJP sum."""
    dt = DT
    mxu_dtype = w_ref.dtype          # bf16 (default) or f32
    W = w_ref[...]                   # (H, H), resident
    Wt = wt_ref[...]                 # (H, H) = W^T, resident (no in-kernel transpose)

    s = state_ref[...].astype(jnp.float32)   # (bt, H)
    v = value_ref[...].astype(jnp.float32)   # (bt, H)

    # Per-stage biases precomputed on the host: b+t, b+t-dt/2, b+t-dt.
    bias1 = bias_ref[0:1, :]
    bias23 = bias_ref[1:2, :]
    bias4 = bias_ref[2:3, :]

    def fwd(x, bias):
        pre = jnp.dot(x.astype(mxu_dtype), W,
                      preferred_element_type=jnp.float32) + bias
        return jnp.tanh(pre)         # tanh kept in f32 (EUP), f32 accumulate

    # RK4 stages with incremental k^2 accumulation (only one k live at a time).
    k = fwd(s, bias1)                          # k1
    acc = k * k
    k = fwd(s - (0.5 * dt) * k, bias23)        # k2
    acc = acc + 2.0 * (k * k)
    k = fwd(s - (0.5 * dt) * k, bias23)        # k3
    acc = acc + 2.0 * (k * k)
    k = fwd(s - dt * k, bias4)                 # k4 (needed only for its Jacobian)
    acc = acc + k * k

    # dk1 + 2 dk2 + 2 dk3 + dk4 = [v * (6 - (k1^2 + 2 k2^2 + 2 k3^2 + k4^2))] @ W^T
    g_sum = v * (6.0 - acc)
    dm6 = jnp.dot(g_sum.astype(mxu_dtype), Wt,
                  preferred_element_type=jnp.float32)
    out_ref[...] = (dt / 6.0) * dm6


def vjrk4(t, state, value, W, b, *, mxu_dtype=jnp.bfloat16):
    """DM = dt/6 * (dk1 + 2 dk2 + 2 dk3 + dk4) for f(t,s)=tanh(s@W+b+t)."""
    B, H = state.shape
    mxu_dtype = jnp.dtype(mxu_dtype)
    itemsize = mxu_dtype.itemsize
    f32b = 4
    sublane = 16 if itemsize == 2 else 8      # bf16 blocks want 16-row sublane multiples

    # ---- batch tile from the VMEM window budget (review items 1, 7, 8) ----
    bytes_per_row = 2 * H * (2 * itemsize + f32b)   # 2 bufs x (state+value in, out f32)
    bt_max = max(sublane, min(2048, _WIN_BUDGET_BYTES // max(bytes_per_row, 1)))
    bt_max = (bt_max // sublane) * sublane

    B_pad_min = _round_up(B, sublane)
    n_steps = max(1, -(-B_pad_min // bt_max))
    if n_steps == 1 and B_pad_min >= 2 * sublane:
        n_steps = 2        # keep >= 2 grid steps so both v7x TensorCores get work
    bt = _round_up(-(-B_pad_min // n_steps), sublane)
    B_pad = bt * n_steps

    if B_pad != B:
        pad = B_pad - B
        state = jnp.pad(state, ((0, pad), (0, 0)))
        value = jnp.pad(value, ((0, pad), (0, 0)))

    # Carry the MXU operands in mxu_dtype (halves input HBM bytes for bf16).
    state_in = state.astype(mxu_dtype)
    value_in = value.astype(mxu_dtype)
    w_in = W.astype(mxu_dtype)
    wt_in = W.T.astype(mxu_dtype)             # transpose once on the host

    # Fold t into the three per-stage bias rows (f32, added post-matmul).
    t32 = jnp.asarray(t, jnp.float32)
    b32 = b.astype(jnp.float32)
    biases = jnp.concatenate(
        [b32 + t32, b32 + (t32 - 0.5 * DT), b32 + (t32 - DT)], axis=0)   # (3, H)

    # ---- generation-aware VMEM limit (review items 2, 3, 4) ----
    win_bytes = 2 * bt * H * (2 * itemsize + f32b)          # double-buffered windows
    resident_bytes = 2 * H * H * itemsize + 3 * H * f32b    # W, W^T, biases (1 copy each)
    temp_bytes = 4 * bt * H * f32b                          # s, v, k, acc f32 temporaries
    vmem_need = win_bytes + resident_bytes + temp_bytes
    try:
        vmem_capacity = pltpu.get_tpu_info().vmem_capacity_bytes
    except Exception:
        vmem_capacity = 64 << 20
    vmem_cap = int(vmem_capacity * 0.85)     # ~56 MiB on v7x, ~109 MiB on v5e/v6e
    vmem_limit = int(min(max(vmem_need + (4 << 20), 32 << 20), vmem_cap))

    cost = pl.CostEstimate(
        flops=2 * 5 * B_pad * H * H,              # 4 forward matmuls + 1 fused backward
        transcendentals=4 * B_pad * H,            # 4 tanh evaluations
        bytes_accessed=(2 * B_pad * H * itemsize  # state + value in
                        + B_pad * H * f32b        # DM out
                        + 2 * H * H * itemsize    # W, W^T
                        + 3 * H * f32b),          # biases
    )

    out = pl.pallas_call(
        _vjrk4_kernel,
        out_shape=jax.ShapeDtypeStruct((B_pad, H), jnp.float32),
        grid=(n_steps,),
        in_specs=[
            pl.BlockSpec((bt, H), lambda i: (i, 0)),              # state tile
            pl.BlockSpec((bt, H), lambda i: (i, 0)),              # value tile
            pl.BlockSpec(memory_space=pltpu.MemorySpace.VMEM),    # W   (resident, 1 copy)
            pl.BlockSpec(memory_space=pltpu.MemorySpace.VMEM),    # W^T (resident, 1 copy)
            pl.BlockSpec(memory_space=pltpu.MemorySpace.VMEM),    # per-stage biases (3, H)
        ],
        out_specs=pl.BlockSpec((bt, H), lambda i: (i, 0)),
        compiler_params=pltpu.CompilerParams(
            dimension_semantics=("parallel",),
            vmem_limit_bytes=vmem_limit,
        ),
        cost_estimate=cost,
    )(state_in, value_in, w_in, wt_in, biases)

    return out[:B] if B_pad != B else out


# ---------------- pure-JAX reference (mirrors the PyTorch forward via jax.vjp) ----------
def _reference(t, state, value, W, b):
    def model(tt, ss):
        return jnp.tanh(ss @ W + b + tt)

    def vjp_s(tt, ss):
        _, pullback = jax.vjp(model, tt, ss)
        return pullback(value)[1]

    k1 = model(t, state)
    k2 = model(t - 0.5 * DT, state - 0.5 * DT * k1)
    k3 = model(t - 0.5 * DT, state - 0.5 * DT * k2)
    dk1 = vjp_s(t, state)
    dk2 = vjp_s(t - 0.5 * DT, state - 0.5 * k1 * DT)
    dk3 = vjp_s(t - 0.5 * DT, state - 0.5 * k2 * DT)
    dk4 = vjp_s(t - DT, state - k3 * DT)
    return DT / 6.0 * (dk1 + 2 * dk2 + 2 * dk3 + dk4)


if __name__ == "__main__":
    B, H = 8, 128  # small, TPU-layout-friendly shapes
    key = jax.random.PRNGKey(0)
    k_state, k_value, k_w, k_b = jax.random.split(key, 4)

    state = jax.random.normal(k_state, (B, H), dtype=jnp.float32)
    value = jax.random.normal(k_value, (B, H), dtype=jnp.float32)
    W = jax.random.normal(k_w, (H, H), dtype=jnp.float32) * 0.1
    b = jax.random.normal(k_b, (1, H), dtype=jnp.float32) * 0.1
    t = jnp.float32(0.3)

    ref = _reference(t, state, value, W, b)

    # f32-MXU path: holds the tight tolerance.
    dm_f32 = jax.block_until_ready(vjrk4(t, state, value, W, b, mxu_dtype=jnp.float32))
    assert dm_f32.shape == state.shape and dm_f32.dtype == jnp.float32
    assert jnp.allclose(dm_f32, ref, rtol=1e-4, atol=1e-5), "f32 kernel mismatch vs jax.vjp"

    # bf16-MXU path (default, the fast one): tolerance loosened to bf16 operand precision.
    dm_bf16 = jax.block_until_ready(vjrk4(t, state, value, W, b))
    assert dm_bf16.shape == state.shape and dm_bf16.dtype == jnp.float32
    assert jnp.allclose(dm_bf16, ref, rtol=5e-2, atol=1e-2), "bf16 kernel mismatch vs jax.vjp"

    print("KERNEL_OK")
</pallas_src>

<mosaic_0001>
module attributes {stable_mosaic.version = 11 : i64} {
  func.func @_vjrk4_kernel(%arg0: i32, %arg1: memref<8x128xf32, #tpu.memory_space<vmem>>, %arg2: memref<8x128xf32, #tpu.memory_space<vmem>>, %arg3: memref<128x128xf32, #tpu.memory_space<vmem>>, %arg4: memref<128x128xf32, #tpu.memory_space<vmem>>, %arg5: memref<3x128xf32, #tpu.memory_space<vmem>>, %arg6: memref<8x128xf32, #tpu.memory_space<vmem>>) attributes {dimension_semantics = [#tpu.dimension_semantics<parallel>], iteration_bounds = array<i64: 1>, scalar_prefetch = 0 : i64, scratch_operands = 0 : i64, tpu.core_type = #tpu.core_type<tc>, window_params = [{transform_indices = @transform_0, window_bounds = array<i64: 8, 128>}, {transform_indices = @transform_1, window_bounds = array<i64: 8, 128>}, {pipeline_mode = #tpu.pipeline_mode<synchronous>, transform_indices = @transform_2, window_bounds = array<i64: 128, 128>}, {pipeline_mode = #tpu.pipeline_mode<synchronous>, transform_indices = @transform_3, window_bounds = array<i64: 128, 128>}, {pipeline_mode = #tpu.pipeline_mode<synchronous>, transform_indices = @transform_4, window_bounds = array<i64: 3, 128>}, {transform_indices = @transform_5, window_bounds = array<i64: 8, 128>}]} {
    %c0 = arith.constant 0 : index
    %c0_0 = arith.constant 0 : index
    %0 = vector.load %arg3[%c0, %c0_0] : memref<128x128xf32, #tpu.memory_space<vmem>>, vector<128x128xf32>
    %c0_1 = arith.constant 0 : index
    %c0_2 = arith.constant 0 : index
    %1 = vector.load %arg4[%c0_1, %c0_2] : memref<128x128xf32, #tpu.memory_space<vmem>>, vector<128x128xf32>
    %c0_3 = arith.constant 0 : index
    %c0_4 = arith.constant 0 : index
    %2 = vector.load %arg1[%c0_3, %c0_4] : memref<8x128xf32, #tpu.memory_space<vmem>>, vector<8x128xf32>
    %c0_5 = arith.constant 0 : index
    %c0_6 = arith.constant 0 : index
    %3 = vector.load %arg2[%c0_5, %c0_6] : memref<8x128xf32, #tpu.memory_space<vmem>>, vector<8x128xf32>
    %c0_7 = arith.constant 0 : index
    %c0_8 = arith.constant 0 : index
    %4 = vector.load %arg5[%c0_7, %c0_8] : memref<3x128xf32, #tpu.memory_space<vmem>>, vector<1x128xf32>
    %c1 = arith.constant 1 : index
    %c0_9 = arith.constant 0 : index
    %5 = vector.load %arg5[%c1, %c0_9] : memref<3x128xf32, #tpu.memory_space<vmem>>, vector<1x128xf32>
    %c2 = arith.constant 2 : index
    %c0_10 = arith.constant 0 : index
    %6 = vector.load %arg5[%c2, %c0_10] : memref<3x128xf32, #tpu.memory_space<vmem>>, vector<1x128xf32>
    %cst = arith.constant dense<0.000000e+00> : vector<8x128xf32>
    %7 = tpu.matmul %2, %0, %cst {dimension_numbers = #tpu.dot_dimension_numbers<[1], [0], [0], [1], [0, 0, 1, 1], [], []>} : vector<8x128xf32>, vector<128x128xf32>, vector<8x128xf32> -> vector<8x128xf32>
    %8 = vector.broadcast %4 : vector<1x128xf32> to vector<8x128xf32>
    %9 = arith.addf %7, %8 : vector<8x128xf32>
    %10 = math.tanh %9 : vector<8x128xf32>
    %11 = arith.mulf %10, %10 : vector<8x128xf32>
    %cst_11 = arith.constant 5.000000e-02 : f32
    %12 = vector.broadcast %cst_11 : f32 to vector<8x128xf32>
    %13 = arith.mulf %12, %10 : vector<8x128xf32>
    %14 = arith.subf %2, %13 : vector<8x128xf32>
    %cst_12 = arith.constant dense<0.000000e+00> : vector<8x128xf32>
    %15 = tpu.matmul %14, %0, %cst_12 {dimension_numbers = #tpu.dot_dimension_numbers<[1], [0], [0], [1], [0, 0, 1, 1], [], []>} : vector<8x128xf32>, vector<128x128xf32>, vector<8x128xf32> -> vector<8x128xf32>
    %16 = vector.broadcast %5 : vector<1x128xf32> to vector<8x128xf32>
    %17 = arith.addf %15, %16 : vector<8x128xf32>
    %18 = math.tanh %17 : vector<8x128xf32>
    %19 = arith.mulf %18, %18 : vector<8x128xf32>
    %cst_13 = arith.constant 2.000000e+00 : f32
    %20 = vector.broadcast %cst_13 : f32 to vector<8x128xf32>
    %21 = arith.mulf %20, %19 : vector<8x128xf32>
    %22 = arith.addf %11, %21 : vector<8x128xf32>
    %cst_14 = arith.constant 5.000000e-02 : f32
    %23 = vector.broadcast %cst_14 : f32 to vector<8x128xf32>
    %24 = arith.mulf %23, %18 : vector<8x128xf32>
    %25 = arith.subf %2, %24 : vector<8x128xf32>
    %cst_15 = arith.constant dense<0.000000e+00> : vector<8x128xf32>
    %26 = tpu.matmul %25, %0, %cst_15 {dimension_numbers = #tpu.dot_dimension_numbers<[1], [0], [0], [1], [0, 0, 1, 1], [], []>} : vector<8x128xf32>, vector<128x128xf32>, vector<8x128xf32> -> vector<8x128xf32>
    %27 = vector.broadcast %5 : vector<1x128xf32> to vector<8x128xf32>
    %28 = arith.addf %26, %27 : vector<8x128xf32>
    %29 = math.tanh %28 : vector<8x128xf32>
    %30 = arith.mulf %29, %29 : vector<8x128xf32>
    %cst_16 = arith.constant 2.000000e+00 : f32
    %31 = vector.broadcast %cst_16 : f32 to vector<8x128xf32>
    %32 = arith.mulf %31, %30 : vector<8x128xf32>
    %33 = arith.addf %22, %32 : vector<8x128xf32>
    %cst_17 = arith.constant 1.000000e-01 : f32
    %34 = vector.broadcast %cst_17 : f32 to vector<8x128xf32>
    %35 = arith.mulf %34, %29 : vector<8x128xf32>
    %36 = arith.subf %2, %35 : vector<8x128xf32>
    %cst_18 = arith.constant dense<0.000000e+00> : vector<8x128xf32>
    %37 = tpu.matmul %36, %0, %cst_18 {dimension_numbers = #tpu.dot_dimension_numbers<[1], [0], [0], [1], [0, 0, 1, 1], [], []>} : vector<8x128xf32>, vector<128x128xf32>, vector<8x128xf32> -> vector<8x128xf32>
    %38 = vector.broadcast %6 : vector<1x128xf32> to vector<8x128xf32>
    %39 = arith.addf %37, %38 : vector<8x128xf32>
    %40 = math.tanh %39 : vector<8x128xf32>
    %41 = arith.mulf %40, %40 : vector<8x128xf32>
    %42 = arith.addf %33, %41 : vector<8x128xf32>
    %cst_19 = arith.constant 6.000000e+00 : f32
    %43 = vector.broadcast %cst_19 : f32 to vector<8x128xf32>
    %44 = arith.subf %43, %42 : vector<8x128xf32>
    %45 = arith.mulf %3, %44 : vector<8x128xf32>
    %cst_20 = arith.constant dense<0.000000e+00> : vector<8x128xf32>
    %46 = tpu.matmul %45, %1, %cst_20 {dimension_numbers = #tpu.dot_dimension_numbers<[1], [0], [0], [1], [0, 0, 1, 1], [], []>} : vector<8x128xf32>, vector<128x128xf32>, vector<8x128xf32> -> vector<8x128xf32>
    %cst_21 = arith.constant 0.0166666675 : f32
    %47 = vector.broadcast %cst_21 : f32 to vector<8x128xf32>
    %48 = arith.mulf %47, %46 : vector<8x128xf32>
    %c0_22 = arith.constant 0 : index
    %c0_23 = arith.constant 0 : index
    %49 = vector.load %arg6[%c0_22, %c0_23] : memref<8x128xf32, #tpu.memory_space<vmem>>, vector<8x128xf32>
    tpu.vector_store %arg6[%c0_22, %c0_23], %48 {strides = array<i32>} : memref<8x128xf32, #tpu.memory_space<vmem>>, vector<8x128xf32>,
    return
  }
  func.func @transform_0(%arg0: i32) -> (i32, i32) {
    %c0_i32 = arith.constant 0 : i32
    %c0_i32_0 = arith.constant 0 : i32
    return %arg0, %c0_i32 : i32, i32
  }
  func.func @transform_1(%arg0: i32) -> (i32, i32) {
    %c0_i32 = arith.constant 0 : i32
    %c0_i32_0 = arith.constant 0 : i32
    return %arg0, %c0_i32 : i32, i32
  }
  func.func @transform_2(%arg0: i32) -> (i32, i32) {
    %c0_i32 = arith.constant 0 : i32
    %c0_i32_0 = arith.constant 0 : i32
    %c0_i32_1 = arith.constant 0 : i32
    return %c0_i32, %c0_i32_0 : i32, i32
  }
  func.func @transform_3(%arg0: i32) -> (i32, i32) {
    %c0_i32 = arith.constant 0 : i32
    %c0_i32_0 = arith.constant 0 : i32
    %c0_i32_1 = arith.constant 0 : i32
    return %c0_i32, %c0_i32_0 : i32, i32
  }
  func.func @transform_4(%arg0: i32) -> (i32, i32) {
    %c0_i32 = arith.constant 0 : i32
    %c0_i32_0 = arith.constant 0 : i32
    %c0_i32_1 = arith.constant 0 : i32
    return %c0_i32, %c0_i32_0 : i32, i32
  }
  func.func @transform_5(%arg0: i32) -> (i32, i32) {
    %c0_i32 = arith.constant 0 : i32
    %c0_i32_0 = arith.constant 0 : i32
    return %arg0, %c0_i32 : i32, i32
  }
}

</mosaic_0001>

<llo_original>
// kernel: tpu_custom_call.1
$region0: #{tpu_custom_call.1}
  #allocation0 [shape = 'u32[]', space=smem, size = 0x4, offset = 0x4, fixed_abs, tag = 'smem constant byte address 0x4 - core index']
  #allocation1 [shape = 'u32[144,128]{1,0:T(1,128)}', space=vmem, size = 0x12000, scoped, tag = 'internal scratch']
  %s0 = inlined_call_operand.hbm [shape: f32[8,128], index: 0, kind: input, shape index: {}]
  %s1 = inlined_call_operand.hbm [shape: f32[8,128], index: 1, kind: input, shape index: {}]
  %s2 = inlined_call_operand.hbm [shape: f32[128,128], index: 2, kind: input, shape index: {}]
  %s3 = inlined_call_operand.hbm [shape: f32[128,128], index: 3, kind: input, shape index: {}]
  %s4 = inlined_call_operand.vmem [shape: f32[3,128], index: 4, kind: input, shape index: {}]
  %s5 = inlined_call_operand.hbm [shape: f32[8,128], index: 5, kind: output, shape index: {}]
  %s6 = sld [smem:[#allocation0]]
  $region46: #{tpu_custom_call.1} parent=0
    _
  %s8 = ssub.s32 1, %s6
  %s9 = scalar_select 0, %s8, %s6
  $region1: #{tpu_custom_call.1} parent=0
    #allocation2 [shape = 'u8[4096]{0}', space=vmem, size = 0x1000, scoped, tag = 'input window, operand 0, single buffered']
    #allocation3 [shape = 's32[1]{0}', space=sflag, size = 0x4, scoped, tag = 'scoped memory for tpu_custom_call.1']
    #allocation4 [shape = 's32[1]{0}', space=sflag, size = 0x4, scoped, tag = 'scoped memory for tpu_custom_call.1']
    #allocation5 [shape = 'u8[4096]{0}', space=vmem, size = 0x1000, scoped, tag = 'input window, operand 1, single buffered']
    #allocation6 [shape = 's32[1]{0}', space=sflag, size = 0x4, scoped, tag = 'scoped memory for tpu_custom_call.1']
    #allocation7 [shape = 'u8[65536]{0}', space=vmem, size = 0x10000, scoped, tag = 'input window, operand 2, single buffered']
    #allocation8 [shape = 'u8[65536]{0}', space=vmem, size = 0x10000, scoped, tag = 'input window, operand 3, single buffered']
    #allocation9 [shape = 's32[1]{0}', space=sflag, size = 0x4, scoped, tag = 'scoped memory for tpu_custom_call.1']
    #allocation10 [shape = 'u8[4096]{0}', space=vmem, size = 0x1000, scoped, tag = 'output window, operand 0, single buffered']
    %10 = vsyncpa [#allocation3], 0
    %11 = vsyncpa [#allocation6], 0
    %12 = vsyncpa [#allocation9], 0
    %13 = vsyncpa [#allocation4], 0
    // Predicated region
    $region2: #{tpu_custom_call.1} parent=1 // pred_check
      _
    $region3: #{tpu_custom_call.1} parent=1 // pred_check_branch
      %15 = sbr.rel (0) target = $region5
    $region4: #{tpu_custom_call.1} parent=1 // pred_region
      %s17 = ssub.s32 128, 128
      %18 = vsyncadd [#allocation3], %s17
      %s20 = sshll.u32 [#allocation2], 4
      %s21 = int_to_ptr.vmem [resolvable:$true] %s20
      %23 = dma.hbm_to_vmem [thread:$0]  %s0, 128, %s21, [#allocation3]
    $region5: #{tpu_custom_call.1} parent=1 // pred_fallthru
      _
    // Predicated region
    $region6: #{tpu_custom_call.1} parent=1 // pred_check
      _
    $region7: #{tpu_custom_call.1} parent=1 // pred_check_branch
      %25 = sbr.rel (0) target = $region9
    $region8: #{tpu_custom_call.1} parent=1 // pred_region
      %s27 = ssub.s32 128, 128
      %28 = vsyncadd [#allocation6], %s27
      %s30 = sshll.u32 [#allocation5], 4
      %s31 = int_to_ptr.vmem [resolvable:$true] %s30
      %33 = dma.hbm_to_vmem [thread:$0]  %s1, 128, %s31, [#allocation6]
    $region9: #{tpu_custom_call.1} parent=1 // pred_fallthru
      _
    // Predicated region
    $region10: #{tpu_custom_call.1} parent=1 // pred_check
      _
    $region11: #{tpu_custom_call.1} parent=1 // pred_check_branch
      %35 = sbr.rel (0) target = $region13
    $region12: #{tpu_custom_call.1} parent=1 // pred_region
      %s37 = ssub.s32 2048, 2048
      %38 = vsyncadd [#allocation6], %s37
      %s39 = sshll.u32 [#allocation7], 4
      %s40 = int_to_ptr.vmem [resolvable:$true] %s39
      %45 = dma.hbm_to_vmem [thread:$0]  %s2, 2048, %s40, [#allocation6], 128, 128, 8
    $region13: #{tpu_custom_call.1} parent=1 // pred_fallthru
      _
    // Predicated region
    $region14: #{tpu_custom_call.1} parent=1 // pred_check
      _
    $region15: #{tpu_custom_call.1} parent=1 // pred_check_branch
      %47 = sbr.rel (0) target = $region17
    $region16: #{tpu_custom_call.1} parent=1 // pred_region
      %s49 = ssub.s32 2048, 2048
      %50 = vsyncadd [#allocation9], %s49
      %s51 = sshll.u32 [#allocation8], 4
      %s52 = int_to_ptr.vmem [resolvable:$true] %s51
      %57 = dma.hbm_to_vmem [thread:$0]  %s3, 2048, %s52, [#allocation9], 128, 128, 8
    $region17: #{tpu_custom_call.1} parent=1 // pred_fallthru
      _
    // Predicated region
    $region18: #{tpu_custom_call.1} parent=1 // pred_check
      _
    $region19: #{tpu_custom_call.1} parent=1 // pred_check_branch
      %59 = sbr.rel (0) target = $region21
    $region20: #{tpu_custom_call.1} parent=1 // pred_region
      _
    $region21: #{tpu_custom_call.1} parent=1 // pred_fallthru
      _
    // Predicated region
    $region22: #{tpu_custom_call.1} parent=1 // pred_check
      _
    $region23: #{tpu_custom_call.1} parent=1 // pred_check_branch
      %61 = sbr.rel (0) target = $region25
    $region24: #{tpu_custom_call.1} parent=1 // pred_region
      %62 = dma.done [#allocation3], 128
    $region25: #{tpu_custom_call.1} parent=1 // pred_fallthru
      _
    // Predicated region
    $region26: #{tpu_custom_call.1} parent=1 // pred_check
      _
    $region27: #{tpu_custom_call.1} parent=1 // pred_check_branch
      %64 = sbr.rel (0) target = $region29
    $region28: #{tpu_custom_call.1} parent=1 // pred_region
      %65 = dma.done [#allocation6], 128
    $region29: #{tpu_custom_call.1} parent=1 // pred_fallthru
      _
    // Predicated region
    $region30: #{tpu_custom_call.1} parent=1 // pred_check
      _
    $region31: #{tpu_custom_call.1} parent=1 // pred_check_branch
      %67 = sbr.rel (0) target = $region33
    $region32: #{tpu_custom_call.1} parent=1 // pred_region
      %68 = dma.done [#allocation6], 2048
    $region33: #{tpu_custom_call.1} parent=1 // pred_fallthru
      _
    // Predicated region
    $region34: #{tpu_custom_call.1} parent=1 // pred_check
      _
    $region35: #{tpu_custom_call.1} parent=1 // pred_check_branch
      %70 = sbr.rel (0) target = $region37
    $region36: #{tpu_custom_call.1} parent=1 // pred_region
      %71 = dma.done [#allocation9], 2048
    $region37: #{tpu_custom_call.1} parent=1 // pred_fallthru
      _
    %v72 = vld [vmem:[#allocation7] sm:$0xff]
    %v73 = vld [vmem:[#allocation7 + $0x8] sm:$0xff]
    %v74 = vld [vmem:[#allocation7 + $0x10] sm:$0xff]
    %v75 = vld [vmem:[#allocation7 + $0x18] sm:$0xff]
    %v76 = vld [vmem:[#allocation7 + $0x20] sm:$0xff]
    %v77 = vld [vmem:[#allocation7 + $0x28] sm:$0xff]
    %v78 = vld [vmem:[#allocation7 + $0x30] sm:$0xff]
    %v79 = vld [vmem:[#allocation7 + $0x38] sm:$0xff]
    %v80 = vld [vmem:[#allocation7 + $0x40] sm:$0xff]
    %v81 = vld [vmem:[#allocation7 + $0x48] sm:$0xff]
    %v82 = vld [vmem:[#allocation7 + $0x50] sm:$0xff]
    %v83 = vld [vmem:[#allocation7 + $0x58] sm:$0xff]
    %v84 = vld [vmem:[#allocation7 + $0x60] sm:$0xff]
    %v85 = vld [vmem:[#allocation7 + $0x68] sm:$0xff]
    %v86 = vld [vmem:[#allocation7 + $0x70] sm:$0xff]
    %v87 = vld [vmem:[#allocation7 + $0x78] sm:$0xff]
    %v88 = vld [vmem:[#allocation8] sm:$0xff]
    %v89 = vld [vmem:[#allocation8 + $0x8] sm:$0xff]
    %v90 = vld [vmem:[#allocation8 + $0x10] sm:$0xff]
    %v91 = vld [vmem:[#allocation8 + $0x18] sm:$0xff]
    %v92 = vld [vmem:[#allocation8 + $0x20] sm:$0xff]
    %v93 = vld [vmem:[#allocation8 + $0x28] sm:$0xff]
    %v94 = vld [vmem:[#allocation8 + $0x30] sm:$0xff]
    %v95 = vld [vmem:[#allocation8 + $0x38] sm:$0xff]
    %v96 = vld [vmem:[#allocation8 + $0x40] sm:$0xff]
    %v97 = vld [vmem:[#allocation8 + $0x48] sm:$0xff]
    %v98 = vld [vmem:[#allocation8 + $0x50] sm:$0xff]
    %v99 = vld [vmem:[#allocation8 + $0x58] sm:$0xff]
    %v100 = vld [vmem:[#allocation8 + $0x60] sm:$0xff]
    %v101 = vld [vmem:[#allocation8 + $0x68] sm:$0xff]
    %v102 = vld [vmem:[#allocation8 + $0x70] sm:$0xff]
    %v103 = vld [vmem:[#allocation8 + $0x78] sm:$0xff]
    %v104 = vld [vmem:[#allocation2] sm:$0xff]
    %v105 = vld [vmem:[#allocation5] sm:$0xff]
    %v106 = vld [vmem:[%s4] sm:$0x1]
    %v107 = vld [vmem:[%s4 + $0x1] sm:$0x1]
    %v108 = vld [vmem:[%s4 + $0x2] sm:$0x1]
    %v109 = vlaneseq
    %v110 = vshrl.u32 %v109, 7
    %v111 = vsub.s32 0, %v110
    %v112 = vrot.slane %v106, %v111
    %113 = vmatprep.subr.mxu0 0.0
    %114 = vmatpush1.msra.mxu0 %v87
    %115 = vmatprep.subr.mxu0 0.0
    %116 = vmatpush1.msra.mxu0 %v86
    %117 = vmatprep.subr.mxu0 0.0
    %118 = vmatpush1.msra.mxu0 %v85
    %119 = vmatprep.subr.mxu0 0.0
    %120 = vmatpush1.msra.mxu0 %v84
    %121 = vmatprep.subr.mxu0 0.0
    %122 = vmatpush1.msra.mxu0 %v83
    %123 = vmatprep.subr.mxu0 0.0
    %124 = vmatpush1.msra.mxu0 %v82
    %125 = vmatprep.subr.mxu0 0.0
    %126 = vmatpush1.msra.mxu0 %v81
    %127 = vmatprep.subr.mxu0 0.0
    %128 = vmatpush1.msra.mxu0 %v80
    %129 = vmatprep.subr.mxu0 0.0
    %130 = vmatpush1.msra.mxu0 %v79
    %131 = vmatprep.subr.mxu0 0.0
    %132 = vmatpush1.msra.mxu0 %v78
    %133 = vmatprep.subr.mxu0 0.0
    %134 = vmatpush1.msra.mxu0 %v77
    %135 = vmatprep.subr.mxu0 0.0
    %136 = vmatpush1.msra.mxu0 %v76
    %137 = vmatprep.subr.mxu0 0.0
    %138 = vmatpush1.msra.mxu0 %v75
    %139 = vmatprep.subr.mxu0 0.0
    %140 = vmatpush1.msra.mxu0 %v74
    %141 = vmatprep.subr.mxu0 0.0
    %142 = vmatpush1.msra.mxu0 %v73
    %143 = vmatprep.subr.mxu0 0.0
    %144 = vmatpush1.msra.mxu0 %v72
    %145 = vmatprep.subr.mxu0 0.0
    %146 = vmatpush2.msra.mxu0 0.0
    %147 = vmatprep.subr.mxu0 0.0
    %148 = vmatpush2.msra.mxu0 0.0
    %149 = vmatprep.subr.mxu0 0.0
    %150 = vmatpush2.msra.mxu0 0.0
    %151 = vmatprep.subr.mxu0 0.0
    %152 = vmatpush2.msra.mxu0 0.0
    %153 = vmatprep.subr.mxu0 0.0
    %154 = vmatpush2.msra.mxu0 0.0
    %155 = vmatprep.subr.mxu0 0.0
    %156 = vmatpush2.msra.mxu0 0.0
    %157 = vmatprep.subr.mxu0 0.0
    %158 = vmatpush2.msra.mxu0 0.0
    %159 = vmatprep.subr.mxu0 0.0
    %160 = vmatpush2.msra.mxu0 0.0
    %161 = vmatprep.subr.mxu0 0.0
    %162 = vmatpush2.msra.mxu0 0.0
    %163 = vmatprep.subr.mxu0 0.0
    %164 = vmatpush2.msra.mxu0 0.0
    %165 = vmatprep.subr.mxu0 0.0
    %166 = vmatpush2.msra.mxu0 0.0
    %167 = vmatprep.subr.mxu0 0.0
    %168 = vmatpush2.msra.mxu0 0.0
    %169 = vmatprep.subr.mxu0 0.0
    %170 = vmatpush2.msra.mxu0 0.0
    %171 = vmatprep.subr.mxu0 0.0
    %172 = vmatpush2.msra.mxu0 0.0
    %173 = vmatprep.subr.mxu0 0.0
    %174 = vmatpush2.msra.mxu0 0.0
    %175 = vmatprep.subr.mxu0 0.0
    %176 = vmatpush2.msra.mxu0 0.0
    %177 = vmatprep.mubr.f32.mxu0 0.0
    %178 = vmatmul.mubr.f32.gmra.mxu0 %v104
    %v179 = vpop.f32.mrf.mxu0
    %v180 = vadd.f32 %v112, %v179
    %v181 = vpop.f32.mrf.mxu0
    %182 = vdwg.mxu0
    %v183 = vtanh.pop %v180
    %v184 = vmul.f32 %v183, %v183
    %v185 = vmul.f32 %v183, 0.05
    %v186 = vsub.f32 %v104, %v185
    %v187 = vlaneseq
    %v188 = vshrl.u32 %v187, 7
    %v189 = vsub.s32 0, %v188
    %v190 = vrot.slane %v107, %v189
    %191 = vmatprep.subr.mxu0 0.0
    %192 = vmatpush1.msra.mxu0 %v87
    %193 = vmatprep.subr.mxu0 0.0
    %194 = vmatpush1.msra.mxu0 %v86
    %195 = vmatprep.subr.mxu0 0.0
    %196 = vmatpush1.msra.mxu0 %v85
    %197 = vmatprep.subr.mxu0 0.0
    %198 = vmatpush1.msra.mxu0 %v84
    %199 = vmatprep.subr.mxu0 0.0
    %200 = vmatpush1.msra.mxu0 %v83
    %201 = vmatprep.subr.mxu0 0.0
    %202 = vmatpush1.msra.mxu0 %v82
    %203 = vmatprep.subr.mxu0 0.0
    %204 = vmatpush1.msra.mxu0 %v81
    %205 = vmatprep.subr.mxu0 0.0
    %206 = vmatpush1.msra.mxu0 %v80
    %207 = vmatprep.subr.mxu0 0.0
    %208 = vmatpush1.msra.mxu0 %v79
    %209 = vmatprep.subr.mxu0 0.0
    %210 = vmatpush1.msra.mxu0 %v78
    %211 = vmatprep.subr.mxu0 0.0
    %212 = vmatpush1.msra.mxu0 %v77
    %213 = vmatprep.subr.mxu0 0.0
    %214 = vmatpush1.msra.mxu0 %v76
    %215 = vmatprep.subr.mxu0 0.0
    %216 = vmatpush1.msra.mxu0 %v75
    %217 = vmatprep.subr.mxu0 0.0
    %218 = vmatpush1.msra.mxu0 %v74
    %219 = vmatprep.subr.mxu0 0.0
    %220 = vmatpush1.msra.mxu0 %v73
    %221 = vmatprep.subr.mxu0 0.0
    %222 = vmatpush1.msra.mxu0 %v72
    %223 = vmatprep.subr.mxu0 0.0
    %224 = vmatpush2.msra.mxu0 0.0
    %225 = vmatprep.subr.mxu0 0.0
    %226 = vmatpush2.msra.mxu0 0.0
    %227 = vmatprep.subr.mxu0 0.0
    %228 = vmatpush2.msra.mxu0 0.0
    %229 = vmatprep.subr.mxu0 0.0
    %230 = vmatpush2.msra.mxu0 0.0
    %231 = vmatprep.subr.mxu0 0.0
    %232 = vmatpush2.msra.mxu0 0.0
    %233 = vmatprep.subr.mxu0 0.0
    %234 = vmatpush2.msra.mxu0 0.0
    %235 = vmatprep.subr.mxu0 0.0
    %236 = vmatpush2.msra.mxu0 0.0
    %237 = vmatprep.subr.mxu0 0.0
    %238 = vmatpush2.msra.mxu0 0.0
    %239 = vmatprep.subr.mxu0 0.0
    %240 = vmatpush2.msra.mxu0 0.0
    %241 = vmatprep.subr.mxu0 0.0
    %242 = vmatpush2.msra.mxu0 0.0
    %243 = vmatprep.subr.mxu0 0.0
    %244 = vmatpush2.msra.mxu0 0.0
    %245 = vmatprep.subr.mxu0 0.0
    %246 = vmatpush2.msra.mxu0 0.0
    %247 = vmatprep.subr.mxu0 0.0
    %248 = vmatpush2.msra.mxu0 0.0
    %249 = vmatprep.subr.mxu0 0.0
    %250 = vmatpush2.msra.mxu0 0.0
    %251 = vmatprep.subr.mxu0 0.0
    %252 = vmatpush2.msra.mxu0 0.0
    %253 = vmatprep.subr.mxu0 0.0
    %254 = vmatpush2.msra.mxu0 0.0
    %255 = vmatprep.mubr.f32.mxu0 0.0
    %256 = vmatmul.mubr.f32.gmra.mxu0 %v186
    %v257 = vpop.f32.mrf.mxu0
    %v258 = vadd.f32 %v190, %v257
    %v259 = vpop.f32.mrf.mxu0
    %260 = vdwg.mxu0
    %v261 = vtanh.pop %v258
    %v262 = vmul.f32 %v261, %v261
    %v263 = vmul.f32 %v262, 2.0
    %v264 = vadd.f32 %v184, %v263
    %v265 = vmul.f32 %v261, 0.05
    %v266 = vsub.f32 %v104, %v265
    %267 = vmatprep.subr.mxu0 0.0
    %268 = vmatpush1.msra.mxu0 %v87
    %269 = vmatprep.subr.mxu0 0.0
    %270 = vmatpush1.msra.mxu0 %v86
    %271 = vmatprep.subr.mxu0 0.0
    %272 = vmatpush1.msra.mxu0 %v85
    %273 = vmatprep.subr.mxu0 0.0
    %274 = vmatpush1.msra.mxu0 %v84
    %275 = vmatprep.subr.mxu0 0.0
    %276 = vmatpush1.msra.mxu0 %v83
    %277 = vmatprep.subr.mxu0 0.0
    %278 = vmatpush1.msra.mxu0 %v82
    %279 = vmatprep.subr.mxu0 0.0
    %280 = vmatpush1.msra.mxu0 %v81
    %281 = vmatprep.subr.mxu0 0.0
    %282 = vmatpush1.msra.mxu0 %v80
    %283 = vmatprep.subr.mxu0 0.0
    %284 = vmatpush1.msra.mxu0 %v79
    %285 = vmatprep.subr.mxu0 0.0
    %286 = vmatpush1.msra.mxu0 %v78
    %287 = vmatprep.subr.mxu0 0.0
    %288 = vmatpush1.msra.mxu0 %v77
    %289 = vmatprep.subr.mxu0 0.0
    %290 = vmatpush1.msra.mxu0 %v76
    %291 = vmatprep.subr.mxu0 0.0
    %292 = vmatpush1.msra.mxu0 %v75
    %293 = vmatprep.subr.mxu0 0.0
    %294 = vmatpush1.msra.mxu0 %v74
    %295 = vmatprep.subr.mxu0 0.0
    %296 = vmatpush1.msra.mxu0 %v73
    %297 = vmatprep.subr.mxu0 0.0
    %298 = vmatpush1.msra.mxu0 %v72
    %299 = vmatprep.subr.mxu0 0.0
    %300 = vmatpush2.msra.mxu0 0.0
    %301 = vmatprep.subr.mxu0 0.0
    %302 = vmatpush2.msra.mxu0 0.0
    %303 = vmatprep.subr.mxu0 0.0
    %304 = vmatpush2.msra.mxu0 0.0
    %305 = vmatprep.subr.mxu0 0.0
    %306 = vmatpush2.msra.mxu0 0.0
    %307 = vmatprep.subr.mxu0 0.0
    %308 = vmatpush2.msra.mxu0 0.0
    %309 = vmatprep.subr.mxu0 0.0
    %310 = vmatpush2.msra.mxu0 0.0
    %311 = vmatprep.subr.mxu0 0.0
    %312 = vmatpush2.msra.mxu0 0.0
    %313 = vmatprep.subr.mxu0 0.0
    %314 = vmatpush2.msra.mxu0 0.0
    %315 = vmatprep.subr.mxu0 0.0
    %316 = vmatpush2.msra.mxu0 0.0
    %317 = vmatprep.subr.mxu0 0.0
    %318 = vmatpush2.msra.mxu0 0.0
    %319 = vmatprep.subr.mxu0 0.0
    %320 = vmatpush2.msra.mxu0 0.0
    %321 = vmatprep.subr.mxu0 0.0
    %322 = vmatpush2.msra.mxu0 0.0
    %323 = vmatprep.subr.mxu0 0.0
    %324 = vmatpush2.msra.mxu0 0.0
    %325 = vmatprep.subr.mxu0 0.0
    %326 = vmatpush2.msra.mxu0 0.0
    %327 = vmatprep.subr.mxu0 0.0
    %328 = vmatpush2.msra.mxu0 0.0
    %329 = vmatprep.subr.mxu0 0.0
    %330 = vmatpush2.msra.mxu0 0.0
    %331 = vmatprep.mubr.f32.mxu0 0.0
    %332 = vmatmul.mubr.f32.gmra.mxu0 %v266
    %v333 = vpop.f32.mrf.mxu0
    %v334 = vadd.f32 %v190, %v333
    %v335 = vpop.f32.mrf.mxu0
    %336 = vdwg.mxu0
    %v337 = vtanh.pop %v334
    %v338 = vmul.f32 %v337, %v337
    %v339 = vmul.f32 %v338, 2.0
    %v340 = vadd.f32 %v264, %v339
    %v341 = vmul.f32 %v337, 0.1
    %v342 = vsub.f32 %v104, %v341
    %v343 = vlaneseq
    %v344 = vshrl.u32 %v343, 7
    %v345 = vsub.s32 0, %v344
    %v346 = vrot.slane %v108, %v345
    %347 = vmatprep.subr.mxu0 0.0
    %348 = vmatpush1.msra.mxu0 %v87
    %349 = vmatprep.subr.mxu0 0.0
    %350 = vmatpush1.msra.mxu0 %v86
    %351 = vmatprep.subr.mxu0 0.0
    %352 = vmatpush1.msra.mxu0 %v85
    %353 = vmatprep.subr.mxu0 0.0
    %354 = vmatpush1.msra.mxu0 %v84
    %355 = vmatprep.subr.mxu0 0.0
    %356 = vmatpush1.msra.mxu0 %v83
    %357 = vmatprep.subr.mxu0 0.0
    %358 = vmatpush1.msra.mxu0 %v82
    %359 = vmatprep.subr.mxu0 0.0
    %360 = vmatpush1.msra.mxu0 %v81
    %361 = vmatprep.subr.mxu0 0.0
    %362 = vmatpush1.msra.mxu0 %v80
    %363 = vmatprep.subr.mxu0 0.0
    %364 = vmatpush1.msra.mxu0 %v79
    %365 = vmatprep.subr.mxu0 0.0
    %366 = vmatpush1.msra.mxu0 %v78
    %367 = vmatprep.subr.mxu0 0.0
    %368 = vmatpush1.msra.mxu0 %v77
    %369 = vmatprep.subr.mxu0 0.0
    %370 = vmatpush1.msra.mxu0 %v76
    %371 = vmatprep.subr.mxu0 0.0
    %372 = vmatpush1.msra.mxu0 %v75
    %373 = vmatprep.subr.mxu0 0.0
    %374 = vmatpush1.msra.mxu0 %v74
    %375 = vmatprep.subr.mxu0 0.0
    %376 = vmatpush1.msra.mxu0 %v73
    %377 = vmatprep.subr.mxu0 0.0
    %378 = vmatpush1.msra.mxu0 %v72
    %379 = vmatprep.subr.mxu0 0.0
    %380 = vmatpush2.msra.mxu0 0.0
    %381 = vmatprep.subr.mxu0 0.0
    %382 = vmatpush2.msra.mxu0 0.0
    %383 = vmatprep.subr.mxu0 0.0
    %384 = vmatpush2.msra.mxu0 0.0
    %385 = vmatprep.subr.mxu0 0.0
    %386 = vmatpush2.msra.mxu0 0.0
    %387 = vmatprep.subr.mxu0 0.0
    %388 = vmatpush2.msra.mxu0 0.0
    %389 = vmatprep.subr.mxu0 0.0
    %390 = vmatpush2.msra.mxu0 0.0
    %391 = vmatprep.subr.mxu0 0.0
    %392 = vmatpush2.msra.mxu0 0.0
    %393 = vmatprep.subr.mxu0 0.0
    %394 = vmatpush2.msra.mxu0 0.0
    %395 = vmatprep.subr.mxu0 0.0
    %396 = vmatpush2.msra.mxu0 0.0
    %397 = vmatprep.subr.mxu0 0.0
    %398 = vmatpush2.msra.mxu0 0.0
    %399 = vmatprep.subr.mxu0 0.0
    %400 = vmatpush2.msra.mxu0 0.0
    %401 = vmatprep.subr.mxu0 0.0
    %402 = vmatpush2.msra.mxu0 0.0
    %403 = vmatprep.subr.mxu0 0.0
    %404 = vmatpush2.msra.mxu0 0.0
    %405 = vmatprep.subr.mxu0 0.0
    %406 = vmatpush2.msra.mxu0 0.0
    %407 = vmatprep.subr.mxu0 0.0
    %408 = vmatpush2.msra.mxu0 0.0
    %409 = vmatprep.subr.mxu0 0.0
    %410 = vmatpush2.msra.mxu0 0.0
    %411 = vmatprep.mubr.f32.mxu0 0.0
    %412 = vmatmul.mubr.f32.gmra.mxu0 %v342
    %v413 = vpop.f32.mrf.mxu0
    %v414 = vadd.f32 %v346, %v413
    %v415 = vpop.f32.mrf.mxu0
    %416 = vdwg.mxu0
    %v417 = vtanh.pop %v414
    %v418 = vmul.f32 %v417, %v417
    %v419 = vadd.f32 %v340, %v418
    %v420 = vsub.f32 6.0, %v419
    %v421 = vmul.f32 %v105, %v420
    %422 = vmatprep.subr.mxu0 0.0
    %423 = vmatpush1.msra.mxu0 %v103
    %424 = vmatprep.subr.mxu0 0.0
    %425 = vmatpush1.msra.mxu0 %v102
    %426 = vmatprep.subr.mxu0 0.0
    %427 = vmatpush1.msra.mxu0 %v101
    %428 = vmatprep.subr.mxu0 0.0
    %429 = vmatpush1.msra.mxu0 %v100
    %430 = vmatprep.subr.mxu0 0.0
    %431 = vmatpush1.msra.mxu0 %v99
    %432 = vmatprep.subr.mxu0 0.0
    %433 = vmatpush1.msra.mxu0 %v98
    %434 = vmatprep.subr.mxu0 0.0
    %435 = vmatpush1.msra.mxu0 %v97
    %436 = vmatprep.subr.mxu0 0.0
    %437 = vmatpush1.msra.mxu0 %v96
    %438 = vmatprep.subr.mxu0 0.0
    %439 = vmatpush1.msra.mxu0 %v95
    %440 = vmatprep.subr.mxu0 0.0
    %441 = vmatpush1.msra.mxu0 %v94
    %442 = vmatprep.subr.mxu0 0.0
    %443 = vmatpush1.msra.mxu0 %v93
    %444 = vmatprep.subr.mxu0 0.0
    %445 = vmatpush1.msra.mxu0 %v92
    %446 = vmatprep.subr.mxu0 0.0
    %447 = vmatpush1.msra.mxu0 %v91
    %448 = vmatprep.subr.mxu0 0.0
    %449 = vmatpush1.msra.mxu0 %v90
    %450 = vmatprep.subr.mxu0 0.0
    %451 = vmatpush1.msra.mxu0 %v89
    %452 = vmatprep.subr.mxu0 0.0
    %453 = vmatpush1.msra.mxu0 %v88
    %454 = vmatprep.subr.mxu0 0.0
    %455 = vmatpush2.msra.mxu0 0.0
    %456 = vmatprep.subr.mxu0 0.0
    %457 = vmatpush2.msra.mxu0 0.0
    %458 = vmatprep.subr.mxu0 0.0
    %459 = vmatpush2.msra.mxu0 0.0
    %460 = vmatprep.subr.mxu0 0.0
    %461 = vmatpush2.msra.mxu0 0.0
    %462 = vmatprep.subr.mxu0 0.0
    %463 = vmatpush2.msra.mxu0 0.0
    %464 = vmatprep.subr.mxu0 0.0
    %465 = vmatpush2.msra.mxu0 0.0
    %466 = vmatprep.subr.mxu0 0.0
    %467 = vmatpush2.msra.mxu0 0.0
    %468 = vmatprep.subr.mxu0 0.0
    %469 = vmatpush2.msra.mxu0 0.0
    %470 = vmatprep.subr.mxu0 0.0
    %471 = vmatpush2.msra.mxu0 0.0
    %472 = vmatprep.subr.mxu0 0.0
    %473 = vmatpush2.msra.mxu0 0.0
    %474 = vmatprep.subr.mxu0 0.0
    %475 = vmatpush2.msra.mxu0 0.0
    %476 = vmatprep.subr.mxu0 0.0
    %477 = vmatpush2.msra.mxu0 0.0
    %478 = vmatprep.subr.mxu0 0.0
    %479 = vmatpush2.msra.mxu0 0.0
    %480 = vmatprep.subr.mxu0 0.0
    %481 = vmatpush2.msra.mxu0 0.0
    %482 = vmatprep.subr.mxu0 0.0
    %483 = vmatpush2.msra.mxu0 0.0
    %484 = vmatprep.subr.mxu0 0.0
    %485 = vmatpush2.msra.mxu0 0.0
    %486 = vmatprep.mubr.f32.mxu0 0.0
    %487 = vmatmul.mubr.f32.gmra.mxu0 %v421
    %v488 = vpop.f32.mrf.mxu0
    %v489 = vadd.f32 0.0, %v488
    %v490 = vpop.f32.mrf.mxu0
    %491 = vdwg.mxu0
    %v492 = vmul.f32 %v489, 0.016666668
    %493 = vst [vmem:[#allocation10] sm:$0xff] %v492
    // Predicated region
    $region38: #{tpu_custom_call.1} parent=1 // pred_check
      _
    $region39: #{tpu_custom_call.1} parent=1 // pred_check_branch
      %495 = sbr.rel (0) target = $region41
    $region40: #{tpu_custom_call.1} parent=1 // pred_region
      %s497 = ssub.s32 128, 128
      %498 = vsyncadd [#allocation4], %s497
      %s500 = sshll.u32 [#allocation10], 4
      %s501 = int_to_ptr.vmem [resolvable:$true] %s500
      %503 = dma.vmem_to_hbm [thread:$0]  %s501, 128, %s5, [#allocation4]
    $region41: #{tpu_custom_call.1} parent=1 // pred_fallthru
      _
    // Predicated region
    $region42: #{tpu_custom_call.1} parent=1 // pred_check
      _
    $region43: #{tpu_custom_call.1} parent=1 // pred_check_branch
      %505 = sbr.rel (0) target = $region45
    $region44: #{tpu_custom_call.1} parent=1 // pred_region
      %506 = dma.done [#allocation4], 128
    $region45: #{tpu_custom_call.1} parent=1 // pred_fallthru
      _
    %507 = vsyncpa [#allocation3], 1
    %508 = vsyncpa [#allocation6], 1
    %509 = vsyncpa [#allocation9], 1
    %510 = vsyncpa [#allocation4], 1

</llo_original>
